<compile_context>
chip_gen: v7x
topology: tpu7x:2x2x1
jax: 0.10.0
libtpu: 0.0.40
codegen_flags: <defaults>
</compile_context>

<pallas_src>
import jax
import jax.numpy as jnp
from jax import lax
from jax.experimental import pallas as pl
from jax.experimental.pallas import tpu as pltpu

EPS = 1e-5                       # nn.BatchNorm2d default eps
MATMUL_DTYPE = jnp.float32       # set jnp.bfloat16 on v5e/v6e for MXU peak (looser tol)


# --------------------------------------------------------------------------- #
# Weight preparation (tiny, done once per call in the wrapper, runs in XLA)
# --------------------------------------------------------------------------- #
def _make_banded_weight(wconv, W, k_pad):
    """OIHW 3x3 weight -> 3 banded matrices (k_pad, W*Cout), one per kernel row kh.

    For an (unpadded-in-W) image row flattened to W*Cin lanes,
        y[h, wout*Cout+co] = sum_kh  row_padH[h+kh, :] @ B[kh]
    The W-direction zero padding is embedded in the band (entries with kw out of
    range are zero), so only H padding of the data is needed.
    """
    Cout, Cin = wconv.shape[0], wconv.shape[1]
    kw_idx = jnp.arange(W)[:, None] - jnp.arange(W)[None, :] + 1      # win - wout + 1
    valid = ((kw_idx >= 0) & (kw_idx <= 2)).astype(wconv.dtype)
    kwc = jnp.clip(kw_idx, 0, 2)
    wk = jnp.transpose(wconv, (2, 3, 1, 0))                           # (kh, kw, Cin, Cout)
    band = wk[:, kwc]                                                 # (3, Win, Wout, Cin, Cout)
    band = band * valid[None, :, :, None, None]
    band = jnp.transpose(band, (0, 1, 3, 2, 4))                       # (3, Win, Cin, Wout, Cout)
    band = band.reshape(3, W * Cin, W * Cout)
    if k_pad > W * Cin:
        band = jnp.pad(band, ((0, 0), (0, k_pad - W * Cin), (0, 0)))
    return band


def _make_skip_weight(wskip, W, k_pad):
    """1x1 conv as a block-diagonal (k_pad, W*Cout) matrix over a W*Cin lane row."""
    Cout, Cin = wskip.shape[0], wskip.shape[1]
    ws = wskip.reshape(Cout, Cin).astype(jnp.float32)                 # (Cout, Cin)
    eye = jnp.eye(W, dtype=jnp.float32)
    S = eye[:, None, :, None] * jnp.transpose(ws)[None, :, None, :]   # (Win, Cin, Wout, Cout)
    S = S.reshape(W * Cin, W * Cout)
    if k_pad > W * Cin:
        S = jnp.pad(S, ((0, k_pad - W * Cin), (0, 0)))
    return S


def _pick_nb(N, H, Hp):
    """Images per grid step: as many as reasonable while keeping (8,128)-legal blocks."""
    for nb in range(min(N, 8), 0, -1):
        if N % nb:
            continue
        if nb == N or ((nb * Hp) % 8 == 0 and (nb * H) % 8 == 0):
            return nb
    return 1


def _fold_bn(stats, gamma, beta, count, W, Cout):
    """(per-step partial sums, sumsqs) -> lane-dense BN scale / shift vectors."""
    s = jnp.sum(stats[:, 0, :], axis=0).reshape(W, Cout).sum(axis=0)
    q = jnp.sum(stats[:, 1, :], axis=0).reshape(W, Cout).sum(axis=0)
    mean = s / count
    var = jnp.maximum(q / count - mean * mean, 0.0)   # biased var (PyTorch train fwd)
    scale = gamma.astype(jnp.float32) * lax.rsqrt(var + EPS)
    shift = beta.astype(jnp.float32) - mean * scale   # conv bias cancels under train BN
    sc_vec = jnp.tile(scale, W).reshape(1, W * Cout)
    sh_vec = jnp.tile(shift, W).reshape(1, W * Cout)
    return sc_vec, sh_vec


# --------------------------------------------------------------------------- #
# Pallas kernels
# --------------------------------------------------------------------------- #
def _conv_stats_pass(xp, wb, *, N, NB, H, WC):
    """Pass A: bias-free conv1 -> y1_raw and per-step (sum, sumsq) partial stats."""
    Hp = H + 2
    KP = xp.shape[1]
    G = N // NB

    def kernel(x_ref, w_ref, y_ref, s_ref):
        pf = x_ref[...]                                               # (NB*Hp, KP)
        t0 = jnp.dot(pf, w_ref[0], preferred_element_type=jnp.float32)
        t1 = jnp.dot(pf, w_ref[1], preferred_element_type=jnp.float32)
        t2 = jnp.dot(pf, w_ref[2], preferred_element_type=jnp.float32)
        s_acc = jnp.zeros((1, WC), jnp.float32)
        q_acc = jnp.zeros((1, WC), jnp.float32)
        for n in range(NB):                                           # static unroll
            r = n * Hp
            o = t0[r:r + H] + t1[r + 1:r + 1 + H] + t2[r + 2:r + 2 + H]
            y_ref[pl.ds(n * H, H), :] = o.astype(y_ref.dtype)
            s_acc = s_acc + jnp.sum(o, axis=0, keepdims=True)
            q_acc = q_acc + jnp.sum(o * o, axis=0, keepdims=True)
        s_ref[0:1, :] = s_acc
        s_ref[1:2, :] = q_acc

    return pl.pallas_call(
        kernel,
        out_shape=(jax.ShapeDtypeStruct((N * H, WC), jnp.float32),
                   jax.ShapeDtypeStruct((G, 2, WC), jnp.float32)),
        grid=(G,),
        in_specs=[pl.BlockSpec((NB * Hp, KP), lambda g: (g, 0)),
                  pl.BlockSpec((3, KP, WC), lambda g: (0, 0, 0))],
        out_specs=(pl.BlockSpec((NB * H, WC), lambda g: (g, 0)),
                   pl.BlockSpec((None, 2, WC), lambda g: (g, 0, 0))),
        compiler_params=pltpu.CompilerParams(dimension_semantics=("parallel",)),
    )(xp, wb)


def _apply_bn_conv_pass(y1_raw, wb2, sc1, sh1, *, N, NB, H, WC):
    """Pass B: BN1 scale/shift + Hardswish on y1_raw (elementwise), H-pad h1 in a VMEM
    scratch, bias-free conv2 -> y2_raw and per-step partial stats2."""
    Hp = H + 2
    K2 = wb2.shape[1]
    G = N // NB
    sdtype = wb2.dtype

    def kernel(y_ref, w_ref, sc_ref, sh_ref, y2_ref, s_ref, pad_ref):
        z = y_ref[...] * sc_ref[...] + sh_ref[...]
        h1 = z * jnp.clip(z + 3.0, 0.0, 6.0) * (1.0 / 6.0)
        pad_ref[...] = jnp.zeros_like(pad_ref)                        # zero H-pad rows / lane pad
        for n in range(NB):
            pad_ref[pl.ds(n * Hp + 1, H), 0:WC] = h1[n * H:(n + 1) * H].astype(sdtype)
        pf = pad_ref[...]                                             # (NB*Hp, K2)
        t0 = jnp.dot(pf, w_ref[0], preferred_element_type=jnp.float32)
        t1 = jnp.dot(pf, w_ref[1], preferred_element_type=jnp.float32)
        t2 = jnp.dot(pf, w_ref[2], preferred_element_type=jnp.float32)
        s_acc = jnp.zeros((1, WC), jnp.float32)
        q_acc = jnp.zeros((1, WC), jnp.float32)
        for n in range(NB):
            r = n * Hp
            o = t0[r:r + H] + t1[r + 1:r + 1 + H] + t2[r + 2:r + 2 + H]
            y2_ref[pl.ds(n * H, H), :] = o.astype(y2_ref.dtype)
            s_acc = s_acc + jnp.sum(o, axis=0, keepdims=True)
            q_acc = q_acc + jnp.sum(o * o, axis=0, keepdims=True)
        s_ref[0:1, :] = s_acc
        s_ref[1:2, :] = q_acc

    return pl.pallas_call(
        kernel,
        out_shape=(jax.ShapeDtypeStruct((N * H, WC), jnp.float32),
                   jax.ShapeDtypeStruct((G, 2, WC), jnp.float32)),
        grid=(G,),
        in_specs=[pl.BlockSpec((NB * H, WC), lambda g: (g, 0)),
                  pl.BlockSpec((3, K2, WC), lambda g: (0, 0, 0)),
                  pl.BlockSpec((1, WC), lambda g: (0, 0)),
                  pl.BlockSpec((1, WC), lambda g: (0, 0))],
        out_specs=(pl.BlockSpec((NB * H, WC), lambda g: (g, 0)),
                   pl.BlockSpec((None, 2, WC), lambda g: (g, 0, 0))),
        scratch_shapes=[pltpu.VMEM((NB * Hp, K2), sdtype)],
        compiler_params=pltpu.CompilerParams(dimension_semantics=("parallel",)),
    )(y1_raw, wb2, sc1, sh1)


def _apply_bn_skip_pass(y2_raw, xp, wsk, sc2, sh2, bsk, *, N, NB, H, WC):
    """Pass C: BN2 scale/shift + Hardswish (elementwise) + block-diag 1x1 skip conv
    + residual add."""
    Hp = H + 2
    KP = xp.shape[1]
    G = N // NB

    def kernel(y_ref, x_ref, ws_ref, sc_ref, sh_ref, bs_ref, o_ref):
        z = y_ref[...] * sc_ref[...] + sh_ref[...]
        y = z * jnp.clip(z + 3.0, 0.0, 6.0) * (1.0 / 6.0)
        t = jnp.dot(x_ref[...], ws_ref[...], preferred_element_type=jnp.float32)
        for n in range(NB):
            skip = t[n * Hp + 1:n * Hp + 1 + H]                       # unpadded rows of image n
            o_ref[pl.ds(n * H, H), :] = (y[n * H:(n + 1) * H] + skip + bs_ref[...]
                                         ).astype(o_ref.dtype)

    return pl.pallas_call(
        kernel,
        out_shape=jax.ShapeDtypeStruct((N * H, WC), jnp.float32),
        grid=(G,),
        in_specs=[pl.BlockSpec((NB * H, WC), lambda g: (g, 0)),
                  pl.BlockSpec((NB * Hp, KP), lambda g: (g, 0)),
                  pl.BlockSpec((KP, WC), lambda g: (0, 0)),
                  pl.BlockSpec((1, WC), lambda g: (0, 0)),
                  pl.BlockSpec((1, WC), lambda g: (0, 0)),
                  pl.BlockSpec((1, WC), lambda g: (0, 0))],
        out_specs=pl.BlockSpec((NB * H, WC), lambda g: (g, 0)),
        compiler_params=pltpu.CompilerParams(dimension_semantics=("parallel",)),
    )(y2_raw, xp, wsk, sc2, sh2, bsk)


# --------------------------------------------------------------------------- #
# Wrapper
# --------------------------------------------------------------------------- #
def conv_block_forward(x_nchw, w1, b1, g1, be1, w2, b2, g2, be2, wskip, bskip):
    N, Cin, H, W = x_nchw.shape
    Cout = w1.shape[0]
    Hp = H + 2
    WC = W * Cout
    K1 = W * Cin
    KP = ((K1 + 127) // 128) * 128          # pad contraction to a lane-aligned 128 multiple
    NB = _pick_nb(N, H, Hp)
    count = N * H * W

    # Single layout boundary: NCHW -> lane-dense per-row NHWC; zero-pad H and lanes.
    xr = jnp.transpose(x_nchw, (0, 2, 3, 1)).astype(jnp.float32).reshape(N, H, K1)
    xr = jnp.pad(xr, ((0, 0), (1, 1), (0, KP - K1)))
    xp = xr.reshape(N * Hp, KP).astype(MATMUL_DTYPE)

    wb1 = _make_banded_weight(w1.astype(jnp.float32), W, KP).astype(MATMUL_DTYPE)
    wb2 = _make_banded_weight(w2.astype(jnp.float32), W, WC).astype(MATMUL_DTYPE)
    wsk = _make_skip_weight(wskip, W, KP).astype(MATMUL_DTYPE)
    bsk_vec = jnp.tile(bskip.astype(jnp.float32), W).reshape(1, WC)

    # Pass A: conv1 (bias-free, bias cancels under train-mode BN) + stats1.
    y1_raw, st1 = _conv_stats_pass(xp, wb1, N=N, NB=NB, H=H, WC=WC)
    sc1, sh1 = _fold_bn(st1, g1, be1, count, W, Cout)

    # Pass B: BN1 + Hardswish (elementwise) -> conv2 (bias-free) + stats2.
    y2_raw, st2 = _apply_bn_conv_pass(y1_raw, wb2, sc1, sh1, N=N, NB=NB, H=H, WC=WC)
    sc2, sh2 = _fold_bn(st2, g2, be2, count, W, Cout)

    # Pass C: BN2 + Hardswish + 1x1 skip conv + residual add.
    out2d = _apply_bn_skip_pass(y2_raw, xp, wsk, sc2, sh2, bsk_vec,
                                N=N, NB=NB, H=H, WC=WC)

    out = out2d.reshape(N, H, W, Cout)
    return jnp.transpose(out, (0, 3, 1, 2))                          # back to NCHW


# --------------------------------------------------------------------------- #
# Pure-JAX reference (matches the PyTorch module's train-mode forward)
# --------------------------------------------------------------------------- #
def reference_forward(x, w1, b1, g1, be1, w2, b2, g2, be2, wskip, bskip):
    def conv(a, w, pad):
        return lax.conv_general_dilated(a, w, (1, 1), pad,
                                        dimension_numbers=("NCHW", "OIHW", "NCHW"))

    def bn_hswish(y, g, be):
        mean = jnp.mean(y, axis=(0, 2, 3), keepdims=True)
        var = jnp.mean((y - mean) ** 2, axis=(0, 2, 3), keepdims=True)
        z = (y - mean) * lax.rsqrt(var + EPS) * g.reshape(1, -1, 1, 1) + be.reshape(1, -1, 1, 1)
        return z * jnp.clip(z + 3.0, 0.0, 6.0) / 6.0

    y = conv(x, w1, ((1, 1), (1, 1))) + b1.reshape(1, -1, 1, 1)
    y = bn_hswish(y, g1, be1)
    y = conv(y, w2, ((1, 1), (1, 1))) + b2.reshape(1, -1, 1, 1)
    y = bn_hswish(y, g2, be2)
    s = conv(x, wskip, ((0, 0), (0, 0))) + bskip.reshape(1, -1, 1, 1)
    return s + y


if __name__ == "__main__":
    N, Cin, H, W = 2, 4, 16, 16
    Cout = 8

    keys = jax.random.split(jax.random.PRNGKey(0), 11)
    x = jax.random.normal(keys[0], (N, Cin, H, W), dtype=jnp.float32)
    w1 = jax.random.normal(keys[1], (Cout, Cin, 3, 3), dtype=jnp.float32) * 0.2
    b1 = jax.random.normal(keys[2], (Cout,), dtype=jnp.float32) * 0.1
    g1 = 1.0 + 0.1 * jax.random.normal(keys[3], (Cout,), dtype=jnp.float32)
    be1 = 0.1 * jax.random.normal(keys[4], (Cout,), dtype=jnp.float32)
    w2 = jax.random.normal(keys[5], (Cout, Cout, 3, 3), dtype=jnp.float32) * 0.2
    b2 = jax.random.normal(keys[6], (Cout,), dtype=jnp.float32) * 0.1
    g2 = 1.0 + 0.1 * jax.random.normal(keys[7], (Cout,), dtype=jnp.float32)
    be2 = 0.1 * jax.random.normal(keys[8], (Cout,), dtype=jnp.float32)
    wskip = jax.random.normal(keys[9], (Cout, Cin, 1, 1), dtype=jnp.float32) * 0.2
    bskip = jax.random.normal(keys[10], (Cout,), dtype=jnp.float32) * 0.1

    out = conv_block_forward(x, w1, b1, g1, be1, w2, b2, g2, be2, wskip, bskip)
    out = jax.block_until_ready(out)

    ref = reference_forward(x, w1, b1, g1, be1, w2, b2, g2, be2, wskip, bskip)
    assert out.shape == (N, Cout, H, W), out.shape
    err = float(jnp.max(jnp.abs(out - ref)))
    assert jnp.allclose(out, ref, atol=1e-3, rtol=1e-3), err

    print("KERNEL_OK")
</pallas_src>

<mosaic_0001>
module attributes {stable_mosaic.version = 11 : i64} {
  func.func @kernel(%arg0: i32, %arg1: memref<36x128xf32, #tpu.memory_space<vmem>>, %arg2: memref<3x128x128xf32, #tpu.memory_space<vmem>>, %arg3: memref<32x128xf32, #tpu.memory_space<vmem>>, %arg4: memref<1x2x128xf32, #tpu.memory_space<vmem>>) attributes {dimension_semantics = [#tpu.dimension_semantics<parallel>], iteration_bounds = array<i64: 1>, scalar_prefetch = 0 : i64, scratch_operands = 0 : i64, tpu.core_type = #tpu.core_type<tc>, window_params = [{transform_indices = @transform_0, window_bounds = array<i64: 36, 128>}, {pipeline_mode = #tpu.pipeline_mode<synchronous>, transform_indices = @transform_1, window_bounds = array<i64: 3, 128, 128>}, {transform_indices = @transform_2, window_bounds = array<i64: 32, 128>}, {transform_indices = @transform_3, window_bounds = array<i64: 1, 2, 128>}]} {
    %c0 = arith.constant 0 : index
    %c0_0 = arith.constant 0 : index
    %0 = vector.load %arg1[%c0, %c0_0] : memref<36x128xf32, #tpu.memory_space<vmem>>, vector<36x128xf32>
    %c0_1 = arith.constant 0 : index
    %c0_2 = arith.constant 0 : index
    %c0_3 = arith.constant 0 : index
    %1 = vector.load %arg2[%c0_1, %c0_2, %c0_3] : memref<3x128x128xf32, #tpu.memory_space<vmem>>, vector<1x128x128xf32>
    %2 = vector.shape_cast %1 : vector<1x128x128xf32> to vector<128x128xf32>
    %cst = arith.constant dense<0.000000e+00> : vector<36x128xf32>
    %3 = tpu.matmul %0, %2, %cst {dimension_numbers = #tpu.dot_dimension_numbers<[1], [0], [0], [1], [0, 0, 1, 1], [], []>} : vector<36x128xf32>, vector<128x128xf32>, vector<36x128xf32> -> vector<36x128xf32>
    %c1 = arith.constant 1 : index
    %c0_4 = arith.constant 0 : index
    %c0_5 = arith.constant 0 : index
    %4 = vector.load %arg2[%c1, %c0_4, %c0_5] : memref<3x128x128xf32, #tpu.memory_space<vmem>>, vector<1x128x128xf32>
    %5 = vector.shape_cast %4 : vector<1x128x128xf32> to vector<128x128xf32>
    %cst_6 = arith.constant dense<0.000000e+00> : vector<36x128xf32>
    %6 = tpu.matmul %0, %5, %cst_6 {dimension_numbers = #tpu.dot_dimension_numbers<[1], [0], [0], [1], [0, 0, 1, 1], [], []>} : vector<36x128xf32>, vector<128x128xf32>, vector<36x128xf32> -> vector<36x128xf32>
    %c2 = arith.constant 2 : index
    %c0_7 = arith.constant 0 : index
    %c0_8 = arith.constant 0 : index
    %7 = vector.load %arg2[%c2, %c0_7, %c0_8] : memref<3x128x128xf32, #tpu.memory_space<vmem>>, vector<1x128x128xf32>
    %8 = vector.shape_cast %7 : vector<1x128x128xf32> to vector<128x128xf32>
    %cst_9 = arith.constant dense<0.000000e+00> : vector<36x128xf32>
    %9 = tpu.matmul %0, %8, %cst_9 {dimension_numbers = #tpu.dot_dimension_numbers<[1], [0], [0], [1], [0, 0, 1, 1], [], []>} : vector<36x128xf32>, vector<128x128xf32>, vector<36x128xf32> -> vector<36x128xf32>
    %cst_10 = arith.constant 0.000000e+00 : f32
    %10 = vector.broadcast %cst_10 : f32 to vector<1x128xf32>
    %cst_11 = arith.constant 0.000000e+00 : f32
    %11 = vector.broadcast %cst_11 : f32 to vector<1x128xf32>
    %12 = vector.extract_strided_slice %3 {offsets = [0, 0], sizes = [16, 128], strides = [1, 1]} : vector<36x128xf32> to vector<16x128xf32>
    %13 = vector.extract_strided_slice %6 {offsets = [1, 0], sizes = [16, 128], strides = [1, 1]} : vector<36x128xf32> to vector<16x128xf32>
    %14 = arith.addf %12, %13 : vector<16x128xf32>
    %15 = vector.extract_strided_slice %9 {offsets = [2, 0], sizes = [16, 128], strides = [1, 1]} : vector<36x128xf32> to vector<16x128xf32>
    %16 = arith.addf %14, %15 : vector<16x128xf32>
    %c0_12 = arith.constant 0 : index
    %c0_13 = arith.constant 0 : index
    %17 = vector.load %arg3[%c0_12, %c0_13] : memref<32x128xf32, #tpu.memory_space<vmem>>, vector<16x128xf32>
    tpu.vector_store %arg3[%c0_12, %c0_13], %16 {strides = array<i32>} : memref<32x128xf32, #tpu.memory_space<vmem>>, vector<16x128xf32>,
    %cst_14 = arith.constant dense<0.000000e+00> : vector<128xf32>
    %18 = vector.multi_reduction <add>, %16, %cst_14 [0] : vector<16x128xf32> to vector<128xf32>
    %19 = vector.shape_cast %18 : vector<128xf32> to vector<1x128xf32>
    %20 = arith.addf %10, %19 : vector<1x128xf32>
    %21 = arith.mulf %16, %16 : vector<16x128xf32>
    %cst_15 = arith.constant dense<0.000000e+00> : vector<128xf32>
    %22 = vector.multi_reduction <add>, %21, %cst_15 [0] : vector<16x128xf32> to vector<128xf32>
    %23 = vector.shape_cast %22 : vector<128xf32> to vector<1x128xf32>
    %24 = arith.addf %11, %23 : vector<1x128xf32>
    %25 = vector.extract_strided_slice %3 {offsets = [18, 0], sizes = [16, 128], strides = [1, 1]} : vector<36x128xf32> to vector<16x128xf32>
    %26 = vector.extract_strided_slice %6 {offsets = [19, 0], sizes = [16, 128], strides = [1, 1]} : vector<36x128xf32> to vector<16x128xf32>
    %27 = arith.addf %25, %26 : vector<16x128xf32>
    %28 = vector.extract_strided_slice %9 {offsets = [20, 0], sizes = [16, 128], strides = [1, 1]} : vector<36x128xf32> to vector<16x128xf32>
    %29 = arith.addf %27, %28 : vector<16x128xf32>
    %c16 = arith.constant 16 : index
    %c0_16 = arith.constant 0 : index
    %30 = vector.load %arg3[%c16, %c0_16] : memref<32x128xf32, #tpu.memory_space<vmem>>, vector<16x128xf32>
    tpu.vector_store %arg3[%c16, %c0_16], %29 {strides = array<i32>} : memref<32x128xf32, #tpu.memory_space<vmem>>, vector<16x128xf32>,
    %cst_17 = arith.constant dense<0.000000e+00> : vector<128xf32>
    %31 = vector.multi_reduction <add>, %29, %cst_17 [0] : vector<16x128xf32> to vector<128xf32>
    %32 = vector.shape_cast %31 : vector<128xf32> to vector<1x128xf32>
    %33 = arith.addf %20, %32 : vector<1x128xf32>
    %34 = arith.mulf %29, %29 : vector<16x128xf32>
    %cst_18 = arith.constant dense<0.000000e+00> : vector<128xf32>
    %35 = vector.multi_reduction <add>, %34, %cst_18 [0] : vector<16x128xf32> to vector<128xf32>
    %36 = vector.shape_cast %35 : vector<128xf32> to vector<1x128xf32>
    %37 = arith.addf %24, %36 : vector<1x128xf32>
    %c0_19 = arith.constant 0 : index
    %c0_20 = arith.constant 0 : index
    %c0_21 = arith.constant 0 : index
    %38 = vector.load %arg4[%c0_19, %c0_20, %c0_21] : memref<1x2x128xf32, #tpu.memory_space<vmem>>, vector<1x1x128xf32>
    %39 = vector.shape_cast %38 : vector<1x1x128xf32> to vector<1x128xf32>
    %40 = vector.shape_cast %33 : vector<1x128xf32> to vector<1x1x128xf32>
    tpu.vector_store %arg4[%c0_19, %c0_20, %c0_21], %40 {strides = array<i32>} : memref<1x2x128xf32, #tpu.memory_space<vmem>>, vector<1x1x128xf32>,
    %c0_22 = arith.constant 0 : index
    %c1_23 = arith.constant 1 : index
    %c0_24 = arith.constant 0 : index
    %41 = vector.load %arg4[%c0_22, %c1_23, %c0_24] : memref<1x2x128xf32, #tpu.memory_space<vmem>>, vector<1x1x128xf32>
    %42 = vector.shape_cast %41 : vector<1x1x128xf32> to vector<1x128xf32>
    %43 = vector.shape_cast %37 : vector<1x128xf32> to vector<1x1x128xf32>
    tpu.vector_store %arg4[%c0_22, %c1_23, %c0_24], %43 {strides = array<i32>} : memref<1x2x128xf32, #tpu.memory_space<vmem>>, vector<1x1x128xf32>,
    return
  }
  func.func @transform_0(%arg0: i32) -> (i32, i32) {
    %c0_i32 = arith.constant 0 : i32
    %c0_i32_0 = arith.constant 0 : i32
    return %arg0, %c0_i32 : i32, i32
  }
  func.func @transform_1(%arg0: i32) -> (i32, i32, i32) {
    %c0_i32 = arith.constant 0 : i32
    %c0_i32_0 = arith.constant 0 : i32
    %c0_i32_1 = arith.constant 0 : i32
    %c0_i32_2 = arith.constant 0 : i32
    return %c0_i32, %c0_i32_0, %c0_i32_1 : i32, i32, i32
  }
  func.func @transform_2(%arg0: i32) -> (i32, i32) {
    %c0_i32 = arith.constant 0 : i32
    %c0_i32_0 = arith.constant 0 : i32
    return %arg0, %c0_i32 : i32, i32
  }
  func.func @transform_3(%arg0: i32) -> (i32, i32, i32) {
    %c0_i32 = arith.constant 0 : i32
    %c0_i32_0 = arith.constant 0 : i32
    %c0_i32_1 = arith.constant 0 : i32
    return %arg0, %c0_i32, %c0_i32_0 : i32, i32, i32
  }
}

</mosaic_0001>

<llo_original>
// kernel: tpu_custom_call.1
$region0: #{tpu_custom_call.1}
  #allocation0 [shape = 'u32[]', space=smem, size = 0x4, offset = 0x4, fixed_abs, tag = 'smem constant byte address 0x4 - core index']
  #allocation1 [shape = 'u32[144,128]{1,0:T(1,128)}', space=vmem, size = 0x12000, scoped, tag = 'internal scratch']
  %s0 = inlined_call_operand.hbm [shape: f32[36,128], index: 0, kind: input, shape index: {}]
  %s1 = inlined_call_operand.hbm [shape: f32[3,128,128], index: 1, kind: input, shape index: {}]
  %s2 = inlined_call_operand.hbm [shape: f32[32,128], index: 2, kind: output, shape index: {0}]
  %s3 = inlined_call_operand.hbm [shape: f32[1,2,128], index: 3, kind: output, shape index: {1}]
  %4 = xla_tuple %s2, %s3
  %s5 = sld [smem:[#allocation0]]
  $region34: #{tpu_custom_call.1} parent=0
    _
  %s7 = ssub.s32 1, %s5
  %s8 = scalar_select 0, %s7, %s5
  $region1: #{tpu_custom_call.1} parent=0
    #allocation2 [shape = 'u8[20480]{0}', space=vmem, size = 0x5000, scoped, tag = 'input window, operand 0, single buffered']
    #allocation3 [shape = 's32[1]{0}', space=sflag, size = 0x4, scoped, tag = 'scoped memory for tpu_custom_call.1']
    #allocation4 [shape = 's32[1]{0}', space=sflag, size = 0x4, scoped, tag = 'scoped memory for tpu_custom_call.1']
    #allocation5 [shape = 'u8[196608]{0}', space=vmem, size = 0x30000, scoped, tag = 'input window, operand 1, single buffered']
    #allocation6 [shape = 's32[1]{0}', space=sflag, size = 0x4, scoped, tag = 'scoped memory for tpu_custom_call.1']
    #allocation7 [shape = 'u8[16384]{0}', space=vmem, size = 0x4000, scoped, tag = 'output window, operand 0, single buffered']
    #allocation8 [shape = 'u8[1024]{0}', space=vmem, size = 0x400, scoped, tag = 'output window, operand 1, single buffered']
    #allocation9 [shape = 's32[1]{0}', space=sflag, size = 0x4, scoped, tag = 'scoped memory for tpu_custom_call.1']
    %9 = vsyncpa [#allocation3], 0
    %10 = vsyncpa [#allocation6], 0
    %11 = vsyncpa [#allocation4], 0
    %12 = vsyncpa [#allocation9], 0
    // Predicated region
    $region2: #{tpu_custom_call.1} parent=1 // pred_check
      _
    $region3: #{tpu_custom_call.1} parent=1 // pred_check_branch
      %14 = sbr.rel (0) target = $region5
    $region4: #{tpu_custom_call.1} parent=1 // pred_region
      %s16 = ssub.s32 640, 640
      %17 = vsyncadd [#allocation3], %s16
      %s18 = sshll.u32 [#allocation2], 4
      %s19 = int_to_ptr.vmem [resolvable:$true] %s18
      %24 = dma.hbm_to_vmem [thread:$0]  %s0, 640, %s19, [#allocation3], 128, 128, 8
    $region5: #{tpu_custom_call.1} parent=1 // pred_fallthru
      _
    // Predicated region
    $region6: #{tpu_custom_call.1} parent=1 // pred_check
      _
    $region7: #{tpu_custom_call.1} parent=1 // pred_check_branch
      %26 = sbr.rel (0) target = $region9
    $region8: #{tpu_custom_call.1} parent=1 // pred_region
      %s28 = ssub.s32 6144, 6144
      %29 = vsyncadd [#allocation6], %s28
      %s30 = sshll.u32 [#allocation5], 4
      %s31 = int_to_ptr.vmem [resolvable:$true] %s30
      %36 = dma.hbm_to_vmem [thread:$0]  %s1, 6144, %s31, [#allocation6], 128, 128, 8
    $region9: #{tpu_custom_call.1} parent=1 // pred_fallthru
      _
    // Predicated region
    $region10: #{tpu_custom_call.1} parent=1 // pred_check
      _
    $region11: #{tpu_custom_call.1} parent=1 // pred_check_branch
      %38 = sbr.rel (0) target = $region13
    $region12: #{tpu_custom_call.1} parent=1 // pred_region
      %39 = dma.done [#allocation3], 640
    $region13: #{tpu_custom_call.1} parent=1 // pred_fallthru
      _
    // Predicated region
    $region14: #{tpu_custom_call.1} parent=1 // pred_check
      _
    $region15: #{tpu_custom_call.1} parent=1 // pred_check_branch
      %41 = sbr.rel (0) target = $region17
    $region16: #{tpu_custom_call.1} parent=1 // pred_region
      %42 = dma.done [#allocation6], 6144
    $region17: #{tpu_custom_call.1} parent=1 // pred_fallthru
      _
    %v43 = vld [vmem:[#allocation2] sm:$0xff]
    %v44 = vld [vmem:[#allocation2 + $0x8] sm:$0xff]
    %v45 = vld [vmem:[#allocation2 + $0x10] sm:$0xff]
    %v46 = vld [vmem:[#allocation2 + $0x18] sm:$0xff]
    %v47 = vld [vmem:[#allocation2 + $0x20] sm:$0xf]
    %v48 = vld [vmem:[#allocation5] sm:$0xff]
    %v49 = vld [vmem:[#allocation5 + $0x8] sm:$0xff]
    %v50 = vld [vmem:[#allocation5 + $0x10] sm:$0xff]
    %v51 = vld [vmem:[#allocation5 + $0x18] sm:$0xff]
    %v52 = vld [vmem:[#allocation5 + $0x20] sm:$0xff]
    %v53 = vld [vmem:[#allocation5 + $0x28] sm:$0xff]
    %v54 = vld [vmem:[#allocation5 + $0x30] sm:$0xff]
    %v55 = vld [vmem:[#allocation5 + $0x38] sm:$0xff]
    %v56 = vld [vmem:[#allocation5 + $0x40] sm:$0xff]
    %v57 = vld [vmem:[#allocation5 + $0x48] sm:$0xff]
    %v58 = vld [vmem:[#allocation5 + $0x50] sm:$0xff]
    %v59 = vld [vmem:[#allocation5 + $0x58] sm:$0xff]
    %v60 = vld [vmem:[#allocation5 + $0x60] sm:$0xff]
    %v61 = vld [vmem:[#allocation5 + $0x68] sm:$0xff]
    %v62 = vld [vmem:[#allocation5 + $0x70] sm:$0xff]
    %v63 = vld [vmem:[#allocation5 + $0x78] sm:$0xff]
    %64 = vmatprep.subr.mxu0 0.0
    %65 = vmatpush1.msra.mxu0 %v48
    %66 = vmatprep.subr.mxu0 0.0
    %67 = vmatpush1.msra.mxu0 %v49
    %68 = vmatprep.subr.mxu0 0.0
    %69 = vmatpush1.msra.mxu0 %v50
    %70 = vmatprep.subr.mxu0 0.0
    %71 = vmatpush1.msra.mxu0 %v51
    %72 = vmatprep.subr.mxu0 0.0
    %73 = vmatpush1.msra.mxu0 %v52
    %74 = vmatprep.subr.mxu0 0.0
    %75 = vmatpush1.msra.mxu0 %v53
    %76 = vmatprep.subr.mxu0 0.0
    %77 = vmatpush1.msra.mxu0 %v54
    %78 = vmatprep.subr.mxu0 0.0
    %79 = vmatpush1.msra.mxu0 %v55
    %80 = vmatprep.subr.mxu0 0.0
    %81 = vmatpush1.msra.mxu0 %v56
    %82 = vmatprep.subr.mxu0 0.0
    %83 = vmatpush1.msra.mxu0 %v57
    %84 = vmatprep.subr.mxu0 0.0
    %85 = vmatpush1.msra.mxu0 %v58
    %86 = vmatprep.subr.mxu0 0.0
    %87 = vmatpush1.msra.mxu0 %v59
    %88 = vmatprep.subr.mxu0 0.0
    %89 = vmatpush1.msra.mxu0 %v60
    %90 = vmatprep.subr.mxu0 0.0
    %91 = vmatpush1.msra.mxu0 %v61
    %92 = vmatprep.subr.mxu0 0.0
    %93 = vmatpush1.msra.mxu0 %v62
    %94 = vmatprep.subr.mxu0 0.0
    %95 = vmatpush1.msra.mxu0 %v63
    %96 = vmatprep.subr.mxu0 0.0
    %97 = vmatpush1.msra.mxu0 0.0
    %98 = vmatprep.subr.mxu0 0.0
    %99 = vmatpush1.msra.mxu0 0.0
    %100 = vmatprep.subr.mxu0 0.0
    %101 = vmatpush1.msra.mxu0 0.0
    %102 = vmatprep.subr.mxu0 0.0
    %103 = vmatpush1.msra.mxu0 0.0
    %104 = vmatprep.subr.mxu0 0.0
    %105 = vmatpush1.msra.mxu0 0.0
    %106 = vmatprep.subr.mxu0 0.0
    %107 = vmatpush1.msra.mxu0 0.0
    %108 = vmatprep.subr.mxu0 0.0
    %109 = vmatpush1.msra.mxu0 0.0
    %110 = vmatprep.subr.mxu0 0.0
    %111 = vmatpush1.msra.mxu0 0.0
    %112 = vmatprep.subr.mxu0 0.0
    %113 = vmatpush1.msra.mxu0 0.0
    %114 = vmatprep.subr.mxu0 0.0
    %115 = vmatpush1.msra.mxu0 0.0
    %116 = vmatprep.subr.mxu0 0.0
    %117 = vmatpush1.msra.mxu0 0.0
    %118 = vmatprep.subr.mxu0 0.0
    %119 = vmatpush1.msra.mxu0 0.0
    %120 = vmatprep.subr.mxu0 0.0
    %121 = vmatpush1.msra.mxu0 0.0
    %122 = vmatprep.subr.mxu0 0.0
    %123 = vmatpush1.msra.mxu0 0.0
    %124 = vmatprep.subr.mxu0 0.0
    %125 = vmatpush1.msra.mxu0 0.0
    %126 = vmatprep.subr.mxu0 0.0
    %127 = vmatpush1.msra.mxu0 0.0
    %128 = vmatprep.mubr.f32.mxu0 0.0
    %129 = vmatmul.mubr.f32.gmra.mrb[0].mxu0 %v43
    %v130 = vpop.f32.mrb[0].mxu0
    %v131 = vadd.f32 0.0, %v130
    %v132 = vpop.f32.mrb[0].mxu0
    %133 = vmatprep.mubr.f32.mxu0 0.0
    %134 = vmatmul.mubr.f32.gmra.mrb[0].mxu0 %v44
    %v135 = vpop.f32.mrb[0].mxu0
    %v136 = vadd.f32 0.0, %v135
    %v137 = vpop.f32.mrb[0].mxu0
    %138 = vmatprep.mubr.f32.mxu0 0.0
    %139 = vmatmul.mubr.f32.gmra.mrb[0].mxu0 %v45
    %v140 = vpop.f32.mrb[0].mxu0
    %v141 = vadd.f32 0.0, %v140
    %v142 = vpop.f32.mrb[0].mxu0
    %143 = vmatprep.mubr.f32.mxu0 0.0
    %144 = vmatmul.mubr.f32.gmra.mrb[0].mxu0 %v46
    %v145 = vpop.f32.mrb[0].mxu0
    %v146 = vadd.f32 0.0, %v145
    %v147 = vpop.f32.mrb[0].mxu0
    %148 = vmatprep.mubr.f32.mxu0 0.0
    %149 = vmatmul.mubr.f32.gmra.mrb[0].mxu0 %v47
    %v150 = vpop.f32.mrb[0].mxu0
    %v151 = vadd.f32 0.0, %v150
    %v152 = vpop.f32.mrb[0].mxu0
    %153 = vdwg.mxu0
    %s154 = scalar_lea.vmem [#allocation5], 128
    %v155 = vld [vmem:[%s154] sm:$0xff]
    %v156 = vld [vmem:[%s154 + $0x8] sm:$0xff]
    %v157 = vld [vmem:[%s154 + $0x10] sm:$0xff]
    %v158 = vld [vmem:[%s154 + $0x18] sm:$0xff]
    %v159 = vld [vmem:[%s154 + $0x20] sm:$0xff]
    %v160 = vld [vmem:[%s154 + $0x28] sm:$0xff]
    %v161 = vld [vmem:[%s154 + $0x30] sm:$0xff]
    %v162 = vld [vmem:[%s154 + $0x38] sm:$0xff]
    %v163 = vld [vmem:[%s154 + $0x40] sm:$0xff]
    %v164 = vld [vmem:[%s154 + $0x48] sm:$0xff]
    %v165 = vld [vmem:[%s154 + $0x50] sm:$0xff]
    %v166 = vld [vmem:[%s154 + $0x58] sm:$0xff]
    %v167 = vld [vmem:[%s154 + $0x60] sm:$0xff]
    %v168 = vld [vmem:[%s154 + $0x68] sm:$0xff]
    %v169 = vld [vmem:[%s154 + $0x70] sm:$0xff]
    %v170 = vld [vmem:[%s154 + $0x78] sm:$0xff]
    %171 = vmatprep.subr.mxu0 0.0
    %172 = vmatpush1.msra.mxu0 %v155
    %173 = vmatprep.subr.mxu0 0.0
    %174 = vmatpush1.msra.mxu0 %v156
    %175 = vmatprep.subr.mxu0 0.0
    %176 = vmatpush1.msra.mxu0 %v157
    %177 = vmatprep.subr.mxu0 0.0
    %178 = vmatpush1.msra.mxu0 %v158
    %179 = vmatprep.subr.mxu0 0.0
    %180 = vmatpush1.msra.mxu0 %v159
    %181 = vmatprep.subr.mxu0 0.0
    %182 = vmatpush1.msra.mxu0 %v160
    %183 = vmatprep.subr.mxu0 0.0
    %184 = vmatpush1.msra.mxu0 %v161
    %185 = vmatprep.subr.mxu0 0.0
    %186 = vmatpush1.msra.mxu0 %v162
    %187 = vmatprep.subr.mxu0 0.0
    %188 = vmatpush1.msra.mxu0 %v163
    %189 = vmatprep.subr.mxu0 0.0
    %190 = vmatpush1.msra.mxu0 %v164
    %191 = vmatprep.subr.mxu0 0.0
    %192 = vmatpush1.msra.mxu0 %v165
    %193 = vmatprep.subr.mxu0 0.0
    %194 = vmatpush1.msra.mxu0 %v166
    %195 = vmatprep.subr.mxu0 0.0
    %196 = vmatpush1.msra.mxu0 %v167
    %197 = vmatprep.subr.mxu0 0.0
    %198 = vmatpush1.msra.mxu0 %v168
    %199 = vmatprep.subr.mxu0 0.0
    %200 = vmatpush1.msra.mxu0 %v169
    %201 = vmatprep.subr.mxu0 0.0
    %202 = vmatpush1.msra.mxu0 %v170
    %203 = vmatprep.subr.mxu0 0.0
    %204 = vmatpush1.msra.mxu0 0.0
    %205 = vmatprep.subr.mxu0 0.0
    %206 = vmatpush1.msra.mxu0 0.0
    %207 = vmatprep.subr.mxu0 0.0
    %208 = vmatpush1.msra.mxu0 0.0
    %209 = vmatprep.subr.mxu0 0.0
    %210 = vmatpush1.msra.mxu0 0.0
    %211 = vmatprep.subr.mxu0 0.0
    %212 = vmatpush1.msra.mxu0 0.0
    %213 = vmatprep.subr.mxu0 0.0
    %214 = vmatpush1.msra.mxu0 0.0
    %215 = vmatprep.subr.mxu0 0.0
    %216 = vmatpush1.msra.mxu0 0.0
    %217 = vmatprep.subr.mxu0 0.0
    %218 = vmatpush1.msra.mxu0 0.0
    %219 = vmatprep.subr.mxu0 0.0
    %220 = vmatpush1.msra.mxu0 0.0
    %221 = vmatprep.subr.mxu0 0.0
    %222 = vmatpush1.msra.mxu0 0.0
    %223 = vmatprep.subr.mxu0 0.0
    %224 = vmatpush1.msra.mxu0 0.0
    %225 = vmatprep.subr.mxu0 0.0
    %226 = vmatpush1.msra.mxu0 0.0
    %227 = vmatprep.subr.mxu0 0.0
    %228 = vmatpush1.msra.mxu0 0.0
    %229 = vmatprep.subr.mxu0 0.0
    %230 = vmatpush1.msra.mxu0 0.0
    %231 = vmatprep.subr.mxu0 0.0
    %232 = vmatpush1.msra.mxu0 0.0
    %233 = vmatprep.subr.mxu0 0.0
    %234 = vmatpush1.msra.mxu0 0.0
    %235 = vmatprep.mubr.f32.mxu0 0.0
    %236 = vmatmul.mubr.f32.gmra.mrb[0].mxu0 %v43
    %v237 = vpop.f32.mrb[0].mxu0
    %v238 = vadd.f32 0.0, %v237
    %v239 = vpop.f32.mrb[0].mxu0
    %240 = vmatprep.mubr.f32.mxu0 0.0
    %241 = vmatmul.mubr.f32.gmra.mrb[0].mxu0 %v44
    %v242 = vpop.f32.mrb[0].mxu0
    %v243 = vadd.f32 0.0, %v242
    %v244 = vpop.f32.mrb[0].mxu0
    %245 = vmatprep.mubr.f32.mxu0 0.0
    %246 = vmatmul.mubr.f32.gmra.mrb[0].mxu0 %v45
    %v247 = vpop.f32.mrb[0].mxu0
    %v248 = vadd.f32 0.0, %v247
    %v249 = vpop.f32.mrb[0].mxu0
    %250 = vmatprep.mubr.f32.mxu0 0.0
    %251 = vmatmul.mubr.f32.gmra.mrb[0].mxu0 %v46
    %v252 = vpop.f32.mrb[0].mxu0
    %v253 = vadd.f32 0.0, %v252
    %v254 = vpop.f32.mrb[0].mxu0
    %255 = vmatprep.mubr.f32.mxu0 0.0
    %256 = vmatmul.mubr.f32.gmra.mrb[0].mxu0 %v47
    %v257 = vpop.f32.mrb[0].mxu0
    %v258 = vadd.f32 0.0, %v257
    %v259 = vpop.f32.mrb[0].mxu0
    %260 = vdwg.mxu0
    %s261 = scalar_lea.vmem [#allocation5], 256
    %v262 = vld [vmem:[%s261] sm:$0xff]
    %v263 = vld [vmem:[%s261 + $0x8] sm:$0xff]
    %v264 = vld [vmem:[%s261 + $0x10] sm:$0xff]
    %v265 = vld [vmem:[%s261 + $0x18] sm:$0xff]
    %v266 = vld [vmem:[%s261 + $0x20] sm:$0xff]
    %v267 = vld [vmem:[%s261 + $0x28] sm:$0xff]
    %v268 = vld [vmem:[%s261 + $0x30] sm:$0xff]
    %v269 = vld [vmem:[%s261 + $0x38] sm:$0xff]
    %v270 = vld [vmem:[%s261 + $0x40] sm:$0xff]
    %v271 = vld [vmem:[%s261 + $0x48] sm:$0xff]
    %v272 = vld [vmem:[%s261 + $0x50] sm:$0xff]
    %v273 = vld [vmem:[%s261 + $0x58] sm:$0xff]
    %v274 = vld [vmem:[%s261 + $0x60] sm:$0xff]
    %v275 = vld [vmem:[%s261 + $0x68] sm:$0xff]
    %v276 = vld [vmem:[%s261 + $0x70] sm:$0xff]
    %v277 = vld [vmem:[%s261 + $0x78] sm:$0xff]
    %278 = vmatprep.subr.mxu0 0.0
    %279 = vmatpush1.msra.mxu0 %v262
    %280 = vmatprep.subr.mxu0 0.0
    %281 = vmatpush1.msra.mxu0 %v263
    %282 = vmatprep.subr.mxu0 0.0
    %283 = vmatpush1.msra.mxu0 %v264
    %284 = vmatprep.subr.mxu0 0.0
    %285 = vmatpush1.msra.mxu0 %v265
    %286 = vmatprep.subr.mxu0 0.0
    %287 = vmatpush1.msra.mxu0 %v266
    %288 = vmatprep.subr.mxu0 0.0
    %289 = vmatpush1.msra.mxu0 %v267
    %290 = vmatprep.subr.mxu0 0.0
    %291 = vmatpush1.msra.mxu0 %v268
    %292 = vmatprep.subr.mxu0 0.0
    %293 = vmatpush1.msra.mxu0 %v269
    %294 = vmatprep.subr.mxu0 0.0
    %295 = vmatpush1.msra.mxu0 %v270
    %296 = vmatprep.subr.mxu0 0.0
    %297 = vmatpush1.msra.mxu0 %v271
    %298 = vmatprep.subr.mxu0 0.0
    %299 = vmatpush1.msra.mxu0 %v272
    %300 = vmatprep.subr.mxu0 0.0
    %301 = vmatpush1.msra.mxu0 %v273
    %302 = vmatprep.subr.mxu0 0.0
    %303 = vmatpush1.msra.mxu0 %v274
    %304 = vmatprep.subr.mxu0 0.0
    %305 = vmatpush1.msra.mxu0 %v275
    %306 = vmatprep.subr.mxu0 0.0
    %307 = vmatpush1.msra.mxu0 %v276
    %308 = vmatprep.subr.mxu0 0.0
    %309 = vmatpush1.msra.mxu0 %v277
    %310 = vmatprep.subr.mxu0 0.0
    %311 = vmatpush1.msra.mxu0 0.0
    %312 = vmatprep.subr.mxu0 0.0
    %313 = vmatpush1.msra.mxu0 0.0
    %314 = vmatprep.subr.mxu0 0.0
    %315 = vmatpush1.msra.mxu0 0.0
    %316 = vmatprep.subr.mxu0 0.0
    %317 = vmatpush1.msra.mxu0 0.0
    %318 = vmatprep.subr.mxu0 0.0
    %319 = vmatpush1.msra.mxu0 0.0
    %320 = vmatprep.subr.mxu0 0.0
    %321 = vmatpush1.msra.mxu0 0.0
    %322 = vmatprep.subr.mxu0 0.0
    %323 = vmatpush1.msra.mxu0 0.0
    %324 = vmatprep.subr.mxu0 0.0
    %325 = vmatpush1.msra.mxu0 0.0
    %326 = vmatprep.subr.mxu0 0.0
    %327 = vmatpush1.msra.mxu0 0.0
    %328 = vmatprep.subr.mxu0 0.0
    %329 = vmatpush1.msra.mxu0 0.0
    %330 = vmatprep.subr.mxu0 0.0
    %331 = vmatpush1.msra.mxu0 0.0
    %332 = vmatprep.subr.mxu0 0.0
    %333 = vmatpush1.msra.mxu0 0.0
    %334 = vmatprep.subr.mxu0 0.0
    %335 = vmatpush1.msra.mxu0 0.0
    %336 = vmatprep.subr.mxu0 0.0
    %337 = vmatpush1.msra.mxu0 0.0
    %338 = vmatprep.subr.mxu0 0.0
    %339 = vmatpush1.msra.mxu0 0.0
    %340 = vmatprep.subr.mxu0 0.0
    %341 = vmatpush1.msra.mxu0 0.0
    %342 = vmatprep.mubr.f32.mxu0 0.0
    %343 = vmatmul.mubr.f32.gmra.mrb[0].mxu0 %v43
    %v344 = vpop.f32.mrb[0].mxu0
    %v345 = vadd.f32 0.0, %v344
    %v346 = vpop.f32.mrb[0].mxu0
    %347 = vmatprep.mubr.f32.mxu0 0.0
    %348 = vmatmul.mubr.f32.gmra.mrb[0].mxu0 %v44
    %v349 = vpop.f32.mrb[0].mxu0
    %v350 = vadd.f32 0.0, %v349
    %v351 = vpop.f32.mrb[0].mxu0
    %352 = vmatprep.mubr.f32.mxu0 0.0
    %353 = vmatmul.mubr.f32.gmra.mrb[0].mxu0 %v45
    %v354 = vpop.f32.mrb[0].mxu0
    %v355 = vadd.f32 0.0, %v354
    %v356 = vpop.f32.mrb[0].mxu0
    %357 = vmatprep.mubr.f32.mxu0 0.0
    %358 = vmatmul.mubr.f32.gmra.mrb[0].mxu0 %v46
    %v359 = vpop.f32.mrb[0].mxu0
    %v360 = vadd.f32 0.0, %v359
    %v361 = vpop.f32.mrb[0].mxu0
    %362 = vmatprep.mubr.f32.mxu0 0.0
    %363 = vmatmul.mubr.f32.gmra.mrb[0].mxu0 %v47
    %v364 = vpop.f32.mrb[0].mxu0
    %v365 = vadd.f32 0.0, %v364
    %v366 = vpop.f32.mrb[0].mxu0
    %367 = vdwg.mxu0
    %vm371 = vcmask 1046528
    %v372 = vrot.slane %v238, 1
    %v373 = vrot.slane %v243, 1
    %v374 = vsel %vm371, %v372, %v373
    %v375 = vrot.slane %v248, 1
    %v376 = vsel %vm371, %v373, %v375
    %v379 = vadd.f32 %v131, %v374
    %v380 = vadd.f32 %v136, %v376
    %vm384 = vcmask 1045504
    %v385 = vrot.slane %v345, 2
    %v386 = vrot.slane %v350, 2
    %v387 = vsel %vm384, %v385, %v386
    %v388 = vrot.slane %v355, 2
    %v389 = vsel %vm384, %v386, %v388
    %v392 = vadd.f32 %v379, %v387
    %v393 = vadd.f32 %v380, %v389
    %394 = vst [vmem:[#allocation7] sm:$0xff] %v392
    %395 = vst [vmem:[#allocation7 + $0x8] sm:$0xff] %v393
    %v396 = vadd.f32 %v392, %v393
    %v397 = vrot.slane %v396, 4
    %v398 = vadd.f32 %v396, %v397
    %v399 = vrot.slane %v398, 2
    %v400 = vadd.f32 %v398, %v399
    %v401 = vrot.slane %v400, 1
    %v402 = vadd.f32 %v400, %v401
    %v403 = vadd.f32 %v402, 0.0
    %v404 = vmul.f32 %v392, %v392
    %v405 = vmul.f32 %v393, %v393
    %v406 = vadd.f32 %v404, %v405
    %v407 = vrot.slane %v406, 4
    %v408 = vadd.f32 %v406, %v407
    %v409 = vrot.slane %v408, 2
    %v410 = vadd.f32 %v408, %v409
    %v411 = vrot.slane %v410, 1
    %v412 = vadd.f32 %v410, %v411
    %v413 = vadd.f32 %v412, 0.0
    %v416 = vrot.slane %v253, 1
    %v417 = vsel %vm371, %v375, %v416
    %v418 = vrot.slane %v258, 1
    %v419 = vsel %vm371, %v416, %v418
    %v423 = vadd.f32 %v141, %v417
    %v424 = vadd.f32 %v146, %v419
    %v425 = vadd.f32 %v151, %v418
    %v428 = vrot.slane %v360, 2
    %v429 = vsel %vm384, %v388, %v428
    %v430 = vrot.slane %v365, 2
    %v431 = vsel %vm384, %v428, %v430
    %v435 = vadd.f32 %v423, %v429
    %v436 = vadd.f32 %v424, %v431
    %v437 = vadd.f32 %v425, %v430
    %438 = vst [vmem:[#allocation7 + $0xe] sm:$0xfc] %v435
    %439 = vst [vmem:[#allocation7 + $0x16] sm:$0xff] %v436
    %440 = vst [vmem:[#allocation7 + $0x1e] sm:$0x3] %v437
    %v444 = vrot.slane %v435, 2
    %v445 = vrot.slane %v436, 2
    %v446 = vsel %vm384, %v444, %v445
    %v447 = vrot.slane %v437, 2
    %v448 = vsel %vm384, %v445, %v447
    %v451 = vadd.f32 %v446, %v448
    %v452 = vrot.slane %v451, 4
    %v453 = vadd.f32 %v451, %v452
    %v454 = vrot.slane %v453, 2
    %v455 = vadd.f32 %v453, %v454
    %v456 = vrot.slane %v455, 1
    %v457 = vadd.f32 %v455, %v456
    %v458 = vadd.f32 %v403, %v457
    %v459 = vmul.f32 %v435, %v435
    %v460 = vmul.f32 %v436, %v436
    %v461 = vmul.f32 %v437, %v437
    %v465 = vrot.slane %v459, 2
    %v466 = vrot.slane %v460, 2
    %v467 = vsel %vm384, %v465, %v466
    %v468 = vrot.slane %v461, 2
    %v469 = vsel %vm384, %v466, %v468
    %v472 = vadd.f32 %v467, %v469
    %v473 = vrot.slane %v472, 4
    %v474 = vadd.f32 %v472, %v473
    %v475 = vrot.slane %v474, 2
    %v476 = vadd.f32 %v474, %v475
    %v477 = vrot.slane %v476, 1
    %v478 = vadd.f32 %v476, %v477
    %v479 = vadd.f32 %v413, %v478
    %480 = vst [vmem:[#allocation8] sm:$0x1] %v458
    %481 = vst [vmem:[#allocation8 + $0x1] sm:$0x1] %v479
    // Predicated region
    $region18: #{tpu_custom_call.1} parent=1 // pred_check
      _
    $region19: #{tpu_custom_call.1} parent=1 // pred_check_branch
      %483 = sbr.rel (0) target = $region21
    $region20: #{tpu_custom_call.1} parent=1 // pred_region
      %s485 = ssub.s32 512, 512
      %486 = vsyncadd [#allocation4], %s485
      %s487 = sshll.u32 [#allocation7], 4
      %s488 = int_to_ptr.vmem [resolvable:$true] %s487
      %493 = dma.vmem_to_hbm [thread:$0]  %s488, 512, %s2, [#allocation4], 128, 128, 8
    $region21: #{tpu_custom_call.1} parent=1 // pred_fallthru
      _
    // Predicated region
    $region22: #{tpu_custom_call.1} parent=1 // pred_check
      _
    $region23: #{tpu_custom_call.1} parent=1 // pred_check_branch
      %495 = sbr.rel (0) target = $region25
    $region24: #{tpu_custom_call.1} parent=1 // pred_region
      %s497 = ssub.s32 32, 32
      %498 = vsyncadd [#allocation9], %s497
      %s500 = sshll.u32 [#allocation8], 4
      %s501 = int_to_ptr.vmem [resolvable:$true] %s500
      %503 = dma.vmem_to_hbm [thread:$0]  %s501, 32, %s3, [#allocation9]
    $region25: #{tpu_custom_call.1} parent=1 // pred_fallthru
      _
    // Predicated region
    $region26: #{tpu_custom_call.1} parent=1 // pred_check
      _
    $region27: #{tpu_custom_call.1} parent=1 // pred_check_branch
      %505 = sbr.rel (0) target = $region29
    $region28: #{tpu_custom_call.1} parent=1 // pred_region
      %506 = dma.done [#allocation4], 512
    $region29: #{tpu_custom_call.1} parent=1 // pred_fallthru
      _
    // Predicated region
    $region30: #{tpu_custom_call.1} parent=1 // pred_check
      _
    $region31: #{tpu_custom_call.1} parent=1 // pred_check_branch
      %508 = sbr.rel (0) target = $region33
    $region32: #{tpu_custom_call.1} parent=1 // pred_region
      %509 = dma.done [#allocation9], 32
    $region33: #{tpu_custom_call.1} parent=1 // pred_fallthru
      _
    %510 = vsyncpa [#allocation3], 1
    %511 = vsyncpa [#allocation6], 1
    %512 = vsyncpa [#allocation4], 1
    %513 = vsyncpa [#allocation9], 1

</llo_original>
